<compile_context>
chip_gen: v7x
topology: tpu7x:2x2x1
jax: 0.10.0
libtpu: 0.0.40
codegen_flags: <defaults>
</compile_context>

<pallas_src>
import math

import jax
import jax.numpy as jnp
from jax import lax
from jax.experimental import pallas as pl
from jax.experimental.pallas import tpu as pltpu

N_CLASSES = 20                 # amino-acid classes
T_EMB = 12                     # sinusoidal time-embedding width (synthetic model)
IN_W = N_CLASSES + T_EMB       # 32: fused [one_hot(X_t) | t_emb] input width
HIDDEN = 64                    # synthetic model hidden width
OUT_W = N_CLASSES + 1          # 21: fused [logits | sasa] output width
TIMESTEPS = 1000               # diffusion timesteps
SASA_COEFF = 0.5               # config['sasa_loss_coeff']
DEFAULT_TILE_N = 1024          # node-tile (multiple of 8; 1k-4k amortizes per-step cost)


def _round_up(a, b):
    return (a + b - 1) // b * b


def _digress_tile_kernel(nvalid_ref,
                         x_ref, gum_ref, temb_ref, sasa_ref, abar_ref,
                         w1_ref, b1_ref, w23_ref, b23_ref,
                         part_ref):
    pid = pl.program_id(0)
    tile = x_ref.shape[0]

    x = x_ref[...]                        # (T, 20) one-hot / soft x0
    a = abar_ref[...]                     # (T, 1) alpha_bar per node

    # ---- apply_noise: uniform-transition Qtb = a*I + (1-a)/K, hence
    # prob_X = Qtb[batch] @ x0 = a*x0 + (1-a)/K  (no (N,20,20) tensor / DMA).
    prob = a * x + (1.0 - a) * (1.0 / N_CLASSES)
    inv = pl.reciprocal(jnp.sum(prob, axis=1, keepdims=True), approx=True)
    prob = prob * inv                     # row-normalize (argmax-invariant anyway)

    # multinomial(1) == categorical sample via Gumbel-max with host noise.
    # log(0) = -inf is fine: it only feeds the argmax and never wins.
    scores = jnp.log(prob) + gum_ref[...]
    x_t = jnp.argmax(scores, axis=1, keepdims=True)                 # (T, 1)
    col = lax.broadcasted_iota(jnp.int32, (tile, N_CLASSES), 1)
    noise_x = (col == x_t).astype(jnp.float32)                      # one_hot(X_t)

    # ---- synthetic denoising model (stand-in for self.model): fused 2-layer MLP
    inp = jnp.concatenate([noise_x, temb_ref[...]], axis=-1)        # (T, 32)
    h = jnp.dot(inp, w1_ref[...], preferred_element_type=jnp.float32)
    h = jnp.maximum(h + b1_ref[...], 0.0)                           # (T, H)
    out = jnp.dot(h, w23_ref[...], preferred_element_type=jnp.float32) + b23_ref[...]
    pred_x = out[:, :N_CLASSES]                                     # (T, 20) logits
    pred_sasa = out[:, N_CLASSES:OUT_W]                             # (T, 1)

    # ---- ragged-tail mask from prefetched true node count
    row = pid * tile + lax.broadcasted_iota(jnp.int32, (tile, 1), 0)
    mask = (row < nvalid_ref[0]).astype(jnp.float32)                # (T, 1)

    # ---- cross_entropy(pred_X, x0) partial sum (soft/one-hot target)
    m = jnp.max(pred_x, axis=1, keepdims=True)
    lse = m + jnp.log(jnp.sum(jnp.exp(pred_x - m), axis=1, keepdims=True))
    ce_pn = -jnp.sum(x * (pred_x - lse), axis=1, keepdims=True)     # (T, 1)
    ce_sum = jnp.sum(ce_pn * mask, axis=0, keepdims=True)           # (1, 1)

    # ---- mse(pred_sasa, sasa) partial sum
    diff = (pred_sasa - sasa_ref[...]) * mask
    mse_sum = jnp.sum(diff * diff, axis=0, keepdims=True)           # (1, 1)

    part_ref[...] = jnp.concatenate([ce_sum, mse_sum], axis=-1).reshape(1, 1, 2)


def sparse_digress_forward(x, alpha_bar_n, gumbel, t_emb, sasa, params,
                           *, tile_n=DEFAULT_TILE_N):
    """Fused DiGress forward pass. Returns (loss, ce_loss, coeff*mse_loss)."""
    w1, b1, w23, b23 = params
    n = x.shape[0]

    tile_n = max(8, min(tile_n, _round_up(n, 8)))      # multiple of 8 (f32 sublanes)
    n_pad = _round_up(n, tile_n)
    num_tiles = n_pad // tile_n

    def pad(arr, fill=0.0):
        if n_pad == n:
            return arr
        return jnp.pad(arr, ((0, n_pad - n), (0, 0)), constant_values=fill)

    x_p = pad(x)
    gum_p = pad(gumbel)
    temb_p = pad(t_emb)
    sasa_p = pad(sasa)
    abar_p = pad(alpha_bar_n, fill=0.5)   # any value in (0,1): keeps log(prob) finite
    n_valid = jnp.array([n], jnp.int32)

    # explicit VMEM budget from the actual tile footprint (headroom included)
    bytes_per_node = 4 * (2 * N_CLASSES + T_EMB + 2)
    weight_bytes = 4 * (IN_W * HIDDEN + HIDDEN + HIDDEN * OUT_W + OUT_W)
    vmem_limit = int(min(32 * 2**20,
                         max(16 * 2**20,
                             4 * tile_n * bytes_per_node + 4 * weight_bytes + (2 << 20))))

    grid_spec = pltpu.PrefetchScalarGridSpec(
        num_scalar_prefetch=1,
        grid=(num_tiles,),
        in_specs=[
            pl.BlockSpec((tile_n, N_CLASSES), lambda i, nv: (i, 0)),   # x0
            pl.BlockSpec((tile_n, N_CLASSES), lambda i, nv: (i, 0)),   # gumbel
            pl.BlockSpec((tile_n, T_EMB),     lambda i, nv: (i, 0)),   # t_emb
            pl.BlockSpec((tile_n, 1),         lambda i, nv: (i, 0)),   # sasa
            pl.BlockSpec((tile_n, 1),         lambda i, nv: (i, 0)),   # alpha_bar
            pl.BlockSpec((IN_W, HIDDEN),      lambda i, nv: (0, 0)),   # w1 (resident)
            pl.BlockSpec((1, HIDDEN),         lambda i, nv: (0, 0)),   # b1
            pl.BlockSpec((HIDDEN, OUT_W),     lambda i, nv: (0, 0)),   # w23
            pl.BlockSpec((1, OUT_W),          lambda i, nv: (0, 0)),   # b23
        ],
        out_specs=pl.BlockSpec((1, 1, 2), lambda i, nv: (i, 0, 0)),
    )

    parts = pl.pallas_call(
        _digress_tile_kernel,
        out_shape=jax.ShapeDtypeStruct((num_tiles, 1, 2), jnp.float32),
        grid_spec=grid_spec,
        compiler_params=pltpu.CompilerParams(
            dimension_semantics=("parallel",),
            vmem_limit_bytes=vmem_limit),
    )(n_valid, x_p, gum_p, temb_p, sasa_p, abar_p, w1, b1, w23, b23)

    sums = jnp.sum(parts, axis=(0, 1))          # (2,): [sum CE, sum squared-error]
    ce = sums[0] / n
    mse_term = SASA_COEFF * (sums[1] / n)
    loss = ce + mse_term
    return loss, ce, mse_term


# ------------------------- plain-JAX glue (not hot path) -------------------------

def cosine_alpha_bar(t_norm, s=0.008):
    # DiGress-style cosine schedule for alpha_bar(t/T).
    # TODO(synk): PredefinedNoiseScheduleDiscrete is not in the provided source;
    # this is the standard cosine alpha_bar it wraps.
    f = jnp.cos(0.5 * jnp.pi * (t_norm + s) / (1.0 + s)) ** 2
    f0 = math.cos(0.5 * math.pi * s / (1.0 + s)) ** 2
    return jnp.clip(f / f0, 0.0, 1.0)


def time_embedding(t_per_node, dim=T_EMB):
    half = dim // 2
    freqs = jnp.exp(-math.log(10000.0) * jnp.arange(half, dtype=jnp.float32) / half)
    ang = t_per_node.astype(jnp.float32) * freqs[None, :]
    return jnp.concatenate([jnp.sin(ang), jnp.cos(ang)], axis=-1)


if __name__ == "__main__":
    key = jax.random.PRNGKey(0)
    k = jax.random.split(key, 6)

    B, nodes_per_graph = 2, 8
    N = B * nodes_per_graph
    batch = jnp.repeat(jnp.arange(B), nodes_per_graph)               # data.batch

    labels = jax.random.randint(k[0], (N,), 0, N_CLASSES)
    x = jax.nn.one_hot(labels, N_CLASSES, dtype=jnp.float32)         # data.x
    sasa = jax.random.uniform(k[1], (N, 1), dtype=jnp.float32)       # data.sasa

    # t_int ~ randint(0, timesteps) per graph, as in forward()
    t_int = jax.random.randint(k[2], (B, 1), 0, TIMESTEPS).astype(jnp.float32)
    alpha_bar = cosine_alpha_bar(t_int / TIMESTEPS)                  # (B, 1)
    alpha_bar_n = alpha_bar[batch]                                   # (N, 1) per node

    # gumbel noise for the multinomial sample inside apply_noise
    u = jax.random.uniform(k[3], (N, N_CLASSES), minval=1e-7, maxval=1.0 - 1e-7)
    gumbel = -jnp.log(-jnp.log(u))

    t_emb = time_embedding(t_int[batch])                             # (N, 12)

    # deterministic synthetic-model parameters (stand-in for self.model), fused:
    # W1 acts on [one_hot(X_t) | t_emb]; W23 produces [logits | sasa].
    w1 = 0.1 * jax.random.normal(k[4], (IN_W, HIDDEN), jnp.float32)
    b1 = jnp.zeros((1, HIDDEN), jnp.float32)
    w23 = 0.1 * jax.random.normal(k[5], (HIDDEN, OUT_W), jnp.float32)
    b23 = jnp.zeros((1, OUT_W), jnp.float32)
    params = (w1, b1, w23, b23)

    loss, ce, mse_term = sparse_digress_forward(x, alpha_bar_n, gumbel, t_emb,
                                                sasa, params)
    jax.block_until_ready((loss, ce, mse_term))
    print("KERNEL_OK")
</pallas_src>

<mosaic_0001>
module attributes {stable_mosaic.version = 11 : i64} {
  func.func @_digress_tile_kernel(%arg0: i32, %arg1: memref<1xi32, #tpu.memory_space<smem>>, %arg2: memref<16x20xf32, #tpu.memory_space<vmem>>, %arg3: memref<16x20xf32, #tpu.memory_space<vmem>>, %arg4: memref<16x12xf32, #tpu.memory_space<vmem>>, %arg5: memref<16x1xf32, #tpu.memory_space<vmem>>, %arg6: memref<16x1xf32, #tpu.memory_space<vmem>>, %arg7: memref<32x64xf32, #tpu.memory_space<vmem>>, %arg8: memref<1x64xf32, #tpu.memory_space<vmem>>, %arg9: memref<64x21xf32, #tpu.memory_space<vmem>>, %arg10: memref<1x21xf32, #tpu.memory_space<vmem>>, %arg11: memref<1x1x2xf32, #tpu.memory_space<vmem>>) attributes {dimension_semantics = [#tpu.dimension_semantics<parallel>], iteration_bounds = array<i64: 1>, scalar_prefetch = 1 : i64, scratch_operands = 0 : i64, tpu.core_type = #tpu.core_type<tc>, window_params = [{transform_indices = @transform_0, window_bounds = array<i64: 16, 20>}, {transform_indices = @transform_1, window_bounds = array<i64: 16, 20>}, {transform_indices = @transform_2, window_bounds = array<i64: 16, 12>}, {transform_indices = @transform_3, window_bounds = array<i64: 16, 1>}, {transform_indices = @transform_4, window_bounds = array<i64: 16, 1>}, {pipeline_mode = #tpu.pipeline_mode<synchronous>, transform_indices = @transform_5, window_bounds = array<i64: 32, 64>}, {pipeline_mode = #tpu.pipeline_mode<synchronous>, transform_indices = @transform_6, window_bounds = array<i64: 1, 64>}, {pipeline_mode = #tpu.pipeline_mode<synchronous>, transform_indices = @transform_7, window_bounds = array<i64: 64, 21>}, {pipeline_mode = #tpu.pipeline_mode<synchronous>, transform_indices = @transform_8, window_bounds = array<i64: 1, 21>}, {transform_indices = @transform_9, window_bounds = array<i64: 1, 1, 2>}]} {
    %c0 = arith.constant 0 : index
    %c0_0 = arith.constant 0 : index
    %0 = vector.load %arg2[%c0, %c0_0] : memref<16x20xf32, #tpu.memory_space<vmem>>, vector<16x20xf32>
    %c0_1 = arith.constant 0 : index
    %c0_2 = arith.constant 0 : index
    %1 = vector.load %arg6[%c0_1, %c0_2] : memref<16x1xf32, #tpu.memory_space<vmem>>, vector<16x1xf32>
    %2 = vector.broadcast %1 : vector<16x1xf32> to vector<16x20xf32>
    %3 = arith.mulf %2, %0 : vector<16x20xf32>
    %cst = arith.constant 1.000000e+00 : f32
    %4 = vector.broadcast %cst : f32 to vector<16x1xf32>
    %5 = arith.subf %4, %1 : vector<16x1xf32>
    %cst_3 = arith.constant 5.000000e-02 : f32
    %6 = vector.broadcast %cst_3 : f32 to vector<16x1xf32>
    %7 = arith.mulf %5, %6 : vector<16x1xf32>
    %8 = vector.broadcast %7 : vector<16x1xf32> to vector<16x20xf32>
    %9 = arith.addf %3, %8 : vector<16x20xf32>
    %cst_4 = arith.constant dense<0.000000e+00> : vector<16xf32>
    %10 = vector.multi_reduction <add>, %9, %cst_4 [1] : vector<16x20xf32> to vector<16xf32>
    %11 = vector.shape_cast %10 : vector<16xf32> to vector<16x1xf32>
    %12 = tpu.reciprocal %11 {approx = true} : vector<16x1xf32> -> vector<16x1xf32>
    %13 = vector.broadcast %12 : vector<16x1xf32> to vector<16x20xf32>
    %14 = arith.mulf %9, %13 : vector<16x20xf32>
    %15 = math.log %14 : vector<16x20xf32>
    %c0_5 = arith.constant 0 : index
    %c0_6 = arith.constant 0 : index
    %16 = vector.load %arg3[%c0_5, %c0_6] : memref<16x20xf32, #tpu.memory_space<vmem>>, vector<16x20xf32>
    %17 = arith.addf %15, %16 : vector<16x20xf32>
    %18 = tpu.reduce_index %17 {axis = 1 : i32, kind = #tpu.reduction_kind<arg_max>} : vector<16x20xf32> -> vector<16xi32>
    %19 = vector.shape_cast %18 : vector<16xi32> to vector<16x1xi32>
    %20 = tpu.iota {dimensions = array<i32: 1>} : vector<16x20xi32>
    %21 = vector.broadcast %19 : vector<16x1xi32> to vector<16x20xi32>
    %22 = arith.cmpi eq, %20, %21 : vector<16x20xi32>
    %23 = arith.extui %22 : vector<16x20xi1> to vector<16x20xi32>
    %24 = arith.sitofp %23 : vector<16x20xi32> to vector<16x20xf32>
    %c0_7 = arith.constant 0 : index
    %c0_8 = arith.constant 0 : index
    %25 = vector.load %arg4[%c0_7, %c0_8] : memref<16x12xf32, #tpu.memory_space<vmem>>, vector<16x12xf32>
    %26 = tpu.concatenate %24, %25 in 1 : vector<16x20xf32>, vector<16x12xf32> -> vector<16x32xf32>
    %c0_9 = arith.constant 0 : index
    %c0_10 = arith.constant 0 : index
    %27 = vector.load %arg7[%c0_9, %c0_10] : memref<32x64xf32, #tpu.memory_space<vmem>>, vector<32x64xf32>
    %cst_11 = arith.constant dense<0.000000e+00> : vector<16x64xf32>
    %28 = tpu.matmul %26, %27, %cst_11 {dimension_numbers = #tpu.dot_dimension_numbers<[1], [0], [0], [1], [0, 0, 1, 1], [], []>} : vector<16x32xf32>, vector<32x64xf32>, vector<16x64xf32> -> vector<16x64xf32>
    %c0_12 = arith.constant 0 : index
    %c0_13 = arith.constant 0 : index
    %29 = vector.load %arg8[%c0_12, %c0_13] : memref<1x64xf32, #tpu.memory_space<vmem>>, vector<1x64xf32>
    %30 = vector.broadcast %29 : vector<1x64xf32> to vector<16x64xf32>
    %31 = arith.addf %28, %30 : vector<16x64xf32>
    %cst_14 = arith.constant 0.000000e+00 : f32
    %32 = vector.broadcast %cst_14 : f32 to vector<16x64xf32>
    %33 = arith.maximumf %31, %32 : vector<16x64xf32>
    %c0_15 = arith.constant 0 : index
    %c0_16 = arith.constant 0 : index
    %34 = vector.load %arg9[%c0_15, %c0_16] : memref<64x21xf32, #tpu.memory_space<vmem>>, vector<64x21xf32>
    %cst_17 = arith.constant dense<0.000000e+00> : vector<16x21xf32>
    %35 = tpu.matmul %33, %34, %cst_17 {dimension_numbers = #tpu.dot_dimension_numbers<[1], [0], [0], [1], [0, 0, 1, 1], [], []>} : vector<16x64xf32>, vector<64x21xf32>, vector<16x21xf32> -> vector<16x21xf32>
    %c0_18 = arith.constant 0 : index
    %c0_19 = arith.constant 0 : index
    %36 = vector.load %arg10[%c0_18, %c0_19] : memref<1x21xf32, #tpu.memory_space<vmem>>, vector<1x21xf32>
    %37 = vector.broadcast %36 : vector<1x21xf32> to vector<16x21xf32>
    %38 = arith.addf %35, %37 : vector<16x21xf32>
    %39 = vector.extract_strided_slice %38 {offsets = [0, 0], sizes = [16, 20], strides = [1, 1]} : vector<16x21xf32> to vector<16x20xf32>
    %40 = vector.extract_strided_slice %38 {offsets = [0, 20], sizes = [16, 1], strides = [1, 1]} : vector<16x21xf32> to vector<16x1xf32>
    %c16_i32 = arith.constant 16 : i32
    %41 = arith.muli %arg0, %c16_i32 : i32
    %42 = tpu.iota {dimensions = array<i32: 0>} : vector<16x1xi32>
    %43 = vector.broadcast %41 : i32 to vector<16x1xi32>
    %44 = arith.addi %43, %42 : vector<16x1xi32>
    %c0_20 = arith.constant 0 : index
    %45 = memref.load %arg1[%c0_20] : memref<1xi32, #tpu.memory_space<smem>>
    %46 = vector.broadcast %45 : i32 to vector<16x1xi32>
    %47 = arith.cmpi slt, %44, %46 : vector<16x1xi32>
    %48 = arith.extui %47 : vector<16x1xi1> to vector<16x1xi32>
    %49 = arith.sitofp %48 : vector<16x1xi32> to vector<16x1xf32>
    %cst_21 = arith.constant dense<0xFF800000> : vector<16xf32>
    %50 = vector.multi_reduction <maximumf>, %39, %cst_21 [1] : vector<16x20xf32> to vector<16xf32>
    %51 = vector.shape_cast %50 : vector<16xf32> to vector<16x1xf32>
    %52 = vector.broadcast %51 : vector<16x1xf32> to vector<16x20xf32>
    %53 = arith.subf %39, %52 : vector<16x20xf32>
    %54 = math.exp %53 : vector<16x20xf32>
    %cst_22 = arith.constant dense<0.000000e+00> : vector<16xf32>
    %55 = vector.multi_reduction <add>, %54, %cst_22 [1] : vector<16x20xf32> to vector<16xf32>
    %56 = vector.shape_cast %55 : vector<16xf32> to vector<16x1xf32>
    %57 = math.log %56 : vector<16x1xf32>
    %58 = arith.addf %51, %57 : vector<16x1xf32>
    %59 = vector.broadcast %58 : vector<16x1xf32> to vector<16x20xf32>
    %60 = arith.subf %39, %59 : vector<16x20xf32>
    %61 = arith.mulf %0, %60 : vector<16x20xf32>
    %cst_23 = arith.constant dense<0.000000e+00> : vector<16xf32>
    %62 = vector.multi_reduction <add>, %61, %cst_23 [1] : vector<16x20xf32> to vector<16xf32>
    %63 = vector.shape_cast %62 : vector<16xf32> to vector<16x1xf32>
    %cst_24 = arith.constant 0.000000e+00 : f32
    %64 = vector.broadcast %cst_24 : f32 to vector<16x1xf32>
    %65 = arith.subf %64, %63 : vector<16x1xf32>
    %66 = arith.mulf %65, %49 : vector<16x1xf32>
    %cst_25 = arith.constant dense<0.000000e+00> : vector<1xf32>
    %67 = vector.multi_reduction <add>, %66, %cst_25 [0] : vector<16x1xf32> to vector<1xf32>
    %68 = vector.shape_cast %67 : vector<1xf32> to vector<1x1xf32>
    %c0_26 = arith.constant 0 : index
    %c0_27 = arith.constant 0 : index
    %69 = vector.load %arg5[%c0_26, %c0_27] : memref<16x1xf32, #tpu.memory_space<vmem>>, vector<16x1xf32>
    %70 = arith.subf %40, %69 : vector<16x1xf32>
    %71 = arith.mulf %70, %49 : vector<16x1xf32>
    %72 = arith.mulf %71, %71 : vector<16x1xf32>
    %cst_28 = arith.constant dense<0.000000e+00> : vector<1xf32>
    %73 = vector.multi_reduction <add>, %72, %cst_28 [0] : vector<16x1xf32> to vector<1xf32>
    %74 = vector.shape_cast %73 : vector<1xf32> to vector<1x1xf32>
    %75 = tpu.concatenate %68, %74 in 1 : vector<1x1xf32>, vector<1x1xf32> -> vector<1x2xf32>
    %76 = vector.shape_cast %75 : vector<1x2xf32> to vector<1x1x2xf32>
    %c0_29 = arith.constant 0 : index
    %c0_30 = arith.constant 0 : index
    %c0_31 = arith.constant 0 : index
    %77 = vector.load %arg11[%c0_29, %c0_30, %c0_31] : memref<1x1x2xf32, #tpu.memory_space<vmem>>, vector<1x1x2xf32>
    tpu.vector_store %arg11[%c0_29, %c0_30, %c0_31], %76 {strides = array<i32>} : memref<1x1x2xf32, #tpu.memory_space<vmem>>, vector<1x1x2xf32>,
    return
  }
  func.func @transform_0(%arg0: i32, %arg1: memref<1xi32, #tpu.memory_space<smem>>) -> (i32, i32) {
    %c0_i32 = arith.constant 0 : i32
    %c0_i32_0 = arith.constant 0 : i32
    return %arg0, %c0_i32 : i32, i32
  }
  func.func @transform_1(%arg0: i32, %arg1: memref<1xi32, #tpu.memory_space<smem>>) -> (i32, i32) {
    %c0_i32 = arith.constant 0 : i32
    %c0_i32_0 = arith.constant 0 : i32
    return %arg0, %c0_i32 : i32, i32
  }
  func.func @transform_2(%arg0: i32, %arg1: memref<1xi32, #tpu.memory_space<smem>>) -> (i32, i32) {
    %c0_i32 = arith.constant 0 : i32
    %c0_i32_0 = arith.constant 0 : i32
    return %arg0, %c0_i32 : i32, i32
  }
  func.func @transform_3(%arg0: i32, %arg1: memref<1xi32, #tpu.memory_space<smem>>) -> (i32, i32) {
    %c0_i32 = arith.constant 0 : i32
    %c0_i32_0 = arith.constant 0 : i32
    return %arg0, %c0_i32 : i32, i32
  }
  func.func @transform_4(%arg0: i32, %arg1: memref<1xi32, #tpu.memory_space<smem>>) -> (i32, i32) {
    %c0_i32 = arith.constant 0 : i32
    %c0_i32_0 = arith.constant 0 : i32
    return %arg0, %c0_i32 : i32, i32
  }
  func.func @transform_5(%arg0: i32, %arg1: memref<1xi32, #tpu.memory_space<smem>>) -> (i32, i32) {
    %c0_i32 = arith.constant 0 : i32
    %c0_i32_0 = arith.constant 0 : i32
    %c0_i32_1 = arith.constant 0 : i32
    return %c0_i32, %c0_i32_0 : i32, i32
  }
  func.func @transform_6(%arg0: i32, %arg1: memref<1xi32, #tpu.memory_space<smem>>) -> (i32, i32) {
    %c0_i32 = arith.constant 0 : i32
    %c0_i32_0 = arith.constant 0 : i32
    %c0_i32_1 = arith.constant 0 : i32
    return %c0_i32, %c0_i32_0 : i32, i32
  }
  func.func @transform_7(%arg0: i32, %arg1: memref<1xi32, #tpu.memory_space<smem>>) -> (i32, i32) {
    %c0_i32 = arith.constant 0 : i32
    %c0_i32_0 = arith.constant 0 : i32
    %c0_i32_1 = arith.constant 0 : i32
    return %c0_i32, %c0_i32_0 : i32, i32
  }
  func.func @transform_8(%arg0: i32, %arg1: memref<1xi32, #tpu.memory_space<smem>>) -> (i32, i32) {
    %c0_i32 = arith.constant 0 : i32
    %c0_i32_0 = arith.constant 0 : i32
    %c0_i32_1 = arith.constant 0 : i32
    return %c0_i32, %c0_i32_0 : i32, i32
  }
  func.func @transform_9(%arg0: i32, %arg1: memref<1xi32, #tpu.memory_space<smem>>) -> (i32, i32, i32) {
    %c0_i32 = arith.constant 0 : i32
    %c0_i32_0 = arith.constant 0 : i32
    %c0_i32_1 = arith.constant 0 : i32
    return %arg0, %c0_i32, %c0_i32_0 : i32, i32, i32
  }
}

</mosaic_0001>

<llo_original>
// kernel: tpu_custom_call.1
$region0: #{tpu_custom_call.1}
  #allocation0 [shape = 'u32[]', space=smem, size = 0x4, offset = 0x4, fixed_abs, tag = 'smem constant byte address 0x4 - core index']
  #allocation1 [shape = 'u32[144,128]{1,0:T(1,128)}', space=vmem, size = 0x12000, scoped, tag = 'internal scratch']
  #allocation2 [shape = 's32[1]{0}', space=sflag, size = 0x4, scoped, tag = 'scoped memory for tpu_custom_call.1']
  #allocation3 [shape = 's32[1]{0:T(128)S(6)}', space=smem, size = 0x200, scoped, tag = 'prefetched SMEM operand 0']
  %s0 = inlined_call_operand.<no memory space> [shape: s32[1], index: 0, kind: input, shape index: {}]
  %s1 = inlined_call_operand.vmem [shape: f32[16,20], index: 1, kind: input, shape index: {}]
  %s2 = inlined_call_operand.vmem [shape: f32[16,20], index: 2, kind: input, shape index: {}]
  %s3 = inlined_call_operand.vmem [shape: f32[16,12], index: 3, kind: input, shape index: {}]
  %s4 = inlined_call_operand.vmem [shape: f32[16,1], index: 4, kind: input, shape index: {}]
  %s5 = inlined_call_operand.vmem [shape: f32[16,1], index: 5, kind: input, shape index: {}]
  %s6 = inlined_call_operand.vmem [shape: f32[32,64], index: 6, kind: input, shape index: {}]
  %s7 = inlined_call_operand.vmem [shape: f32[1,64], index: 7, kind: input, shape index: {}]
  %s8 = inlined_call_operand.vmem [shape: f32[64,21], index: 8, kind: input, shape index: {}]
  %s9 = inlined_call_operand.vmem [shape: f32[1,21], index: 9, kind: input, shape index: {}]
  %s10 = inlined_call_operand.hbm [shape: f32[1,1,2], index: 10, kind: output, shape index: {}]
  %s11 = sld [smem:[#allocation0]]
  $region46: #{tpu_custom_call.1} parent=0
    _
  %s13 = ssub.s32 1, %s11
  %s14 = scalar_select 0, %s13, %s11
  %15 = sst [smem:[#allocation3]] %s0
  $region1: #{tpu_custom_call.1} parent=0
    #allocation4 [shape = 'u8[512]{0}', space=vmem, size = 0x400, scoped, tag = 'output window, operand 0, single buffered']
    #allocation5 [shape = 's32[1]{0}', space=sflag, size = 0x4, scoped, tag = 'scoped memory for tpu_custom_call.1']
    %16 = vsyncpa [#allocation5], 0
    // Predicated region
    $region2: #{tpu_custom_call.1} parent=1 // pred_check
      _
    $region3: #{tpu_custom_call.1} parent=1 // pred_check_branch
      %18 = sbr.rel (0) target = $region5
    $region4: #{tpu_custom_call.1} parent=1 // pred_region
      _
    $region5: #{tpu_custom_call.1} parent=1 // pred_fallthru
      _
    // Predicated region
    $region6: #{tpu_custom_call.1} parent=1 // pred_check
      _
    $region7: #{tpu_custom_call.1} parent=1 // pred_check_branch
      %20 = sbr.rel (0) target = $region9
    $region8: #{tpu_custom_call.1} parent=1 // pred_region
      _
    $region9: #{tpu_custom_call.1} parent=1 // pred_fallthru
      _
    // Predicated region
    $region10: #{tpu_custom_call.1} parent=1 // pred_check
      _
    $region11: #{tpu_custom_call.1} parent=1 // pred_check_branch
      %22 = sbr.rel (0) target = $region13
    $region12: #{tpu_custom_call.1} parent=1 // pred_region
      _
    $region13: #{tpu_custom_call.1} parent=1 // pred_fallthru
      _
    // Predicated region
    $region14: #{tpu_custom_call.1} parent=1 // pred_check
      _
    $region15: #{tpu_custom_call.1} parent=1 // pred_check_branch
      %24 = sbr.rel (0) target = $region17
    $region16: #{tpu_custom_call.1} parent=1 // pred_region
      _
    $region17: #{tpu_custom_call.1} parent=1 // pred_fallthru
      _
    // Predicated region
    $region18: #{tpu_custom_call.1} parent=1 // pred_check
      _
    $region19: #{tpu_custom_call.1} parent=1 // pred_check_branch
      %26 = sbr.rel (0) target = $region21
    $region20: #{tpu_custom_call.1} parent=1 // pred_region
      _
    $region21: #{tpu_custom_call.1} parent=1 // pred_fallthru
      _
    // Predicated region
    $region22: #{tpu_custom_call.1} parent=1 // pred_check
      _
    $region23: #{tpu_custom_call.1} parent=1 // pred_check_branch
      %28 = sbr.rel (0) target = $region25
    $region24: #{tpu_custom_call.1} parent=1 // pred_region
      _
    $region25: #{tpu_custom_call.1} parent=1 // pred_fallthru
      _
    // Predicated region
    $region26: #{tpu_custom_call.1} parent=1 // pred_check
      _
    $region27: #{tpu_custom_call.1} parent=1 // pred_check_branch
      %30 = sbr.rel (0) target = $region29
    $region28: #{tpu_custom_call.1} parent=1 // pred_region
      _
    $region29: #{tpu_custom_call.1} parent=1 // pred_fallthru
      _
    // Predicated region
    $region30: #{tpu_custom_call.1} parent=1 // pred_check
      _
    $region31: #{tpu_custom_call.1} parent=1 // pred_check_branch
      %32 = sbr.rel (0) target = $region33
    $region32: #{tpu_custom_call.1} parent=1 // pred_region
      _
    $region33: #{tpu_custom_call.1} parent=1 // pred_fallthru
      _
    // Predicated region
    $region34: #{tpu_custom_call.1} parent=1 // pred_check
      _
    $region35: #{tpu_custom_call.1} parent=1 // pred_check_branch
      %34 = sbr.rel (0) target = $region37
    $region36: #{tpu_custom_call.1} parent=1 // pred_region
      _
    $region37: #{tpu_custom_call.1} parent=1 // pred_fallthru
      _
    %v35 = vld [vmem:[%s1] sm:$0xff]
    %v36 = vld [vmem:[%s1 + $0x8] sm:$0xff]
    %v37 = vld [vmem:[%s5] sm:$0xff]
    %v38 = vld [vmem:[%s5 + $0x8] sm:$0xff]
    %40 = vset.pattern.permute.xlu0 0
    %41 = vperm.xlu0 %40, %v37
    %v42 = vpop.permute.xlu0 %41
    %45 = vset.pattern.permute.xlu0 0
    %46 = vperm.xlu0 %45, %v38
    %v47 = vpop.permute.xlu0 %46
    %v49 = vmul.f32 %v42, %v35
    %v50 = vmul.f32 %v47, %v36
    %v51 = vsub.f32 1.0, %v37
    %v52 = vsub.f32 1.0, %v38
    %v53 = vmul.f32 %v51, 0.05
    %v54 = vmul.f32 %v52, 0.05
    %56 = vset.pattern.permute.xlu0 0
    %57 = vperm.xlu0 %56, %v53
    %v58 = vpop.permute.xlu0 %57
    %61 = vset.pattern.permute.xlu0 0
    %62 = vperm.xlu0 %61, %v54
    %v63 = vpop.permute.xlu0 %62
    %v65 = vadd.f32 %v49, %v58
    %v66 = vadd.f32 %v50, %v63
    %vm67 = vcmask 162816
    %v68 = vsel %vm67, %v65, 0.0
    %69 = vadd.xlane.f32.xlu0 %v68
    %v70 = vpop.xlane.xlu0 %69
    %v71 = vsel %vm67, %v66, 0.0
    %72 = vadd.xlane.f32.xlu0 %v71
    %v73 = vpop.xlane.xlu0 %72
    %v74 = vrcp.pop %v70
    %v75 = vrcp.pop %v73
    %v76 = vmul.f32 %v65, %v74
    %v77 = vmul.f32 %v66, %v75
    %v78 = vlog2.pop %v76
    %v79 = vmul.f32 %v78, 0.6931472
    %v80 = vlog2.pop %v77
    %v81 = vmul.f32 %v80, 0.6931472
    %v82 = vld [vmem:[%s2] sm:$0xff]
    %v83 = vld [vmem:[%s2 + $0x8] sm:$0xff]
    %v84 = vadd.f32 %v79, %v82
    %v85 = vadd.f32 %v81, %v83
    %v86 = vsel %vm67, %v84, -inf
    %87 = vmax.index.xlane.f32.xlu0 %v86
    %v88 = vpop.xlane.xlu0 %87
    %v89 = vsel %vm67, %v85, -inf
    %90 = vmax.index.xlane.f32.xlu0 %v89
    %v91 = vpop.xlane.xlu0 %90
    %v92 = vlaneseq
    %v93 = vand.u32 %v92, 127
    %vm94 = vcmp.eq.s32.totalorder %v93, %v88
    %vm95 = vcmp.eq.s32.totalorder %v93, %v91
    %v96 = vsel %vm94, 1, 0
    %v97 = vsel %vm95, 1, 0
    %v98 = vcvt.s32.f32 %v96
    %v99 = vcvt.s32.f32 %v97
    %v100 = vld [vmem:[%s3] sm:$0xff]
    %v101 = vld [vmem:[%s3 + $0x8] sm:$0xff]
    %104 = vrot.lane.b32.xlu0 %v100, 20
    %v105 = vpop.permute.xlu0 %104
    %106 = vrot.lane.b32.xlu0 %v101, 20
    %v107 = vpop.permute.xlu0 %106
    %v110 = vsel %vm67, %v98, %v105
    %v111 = vsel %vm67, %v99, %v107
    %v112 = vld [vmem:[%s6] sm:$0xff]
    %v113 = vld [vmem:[%s6 + $0x8] sm:$0xff]
    %v114 = vld [vmem:[%s6 + $0x10] sm:$0xff]
    %v115 = vld [vmem:[%s6 + $0x18] sm:$0xff]
    %v116 = vld [vmem:[%s7] sm:$0x1]
    %v118 = vlaneseq
    %v119 = vshrl.u32 %v118, 7
    %v120 = vsub.s32 0, %v119
    %v121 = vrot.slane %v116, %v120
    %vm123 = vcmask 261120
    %v125 = vsel %vm123, %v110, 0
    %v128 = vsel %vm123, %v111, 0
    %130 = vmatprep.subr.mxu0 0.0
    %131 = vmatpush1.msra.mxu0 %v112
    %132 = vmatprep.subr.mxu0 0.0
    %133 = vmatpush1.msra.mxu0 %v113
    %134 = vmatprep.subr.mxu0 0.0
    %135 = vmatpush1.msra.mxu0 %v114
    %136 = vmatprep.subr.mxu0 0.0
    %137 = vmatpush1.msra.mxu0 %v115
    %138 = vmatprep.subr.mxu0 0.0
    %139 = vmatpush1.msra.mxu0 0.0
    %140 = vmatprep.subr.mxu0 0.0
    %141 = vmatpush1.msra.mxu0 0.0
    %142 = vmatprep.subr.mxu0 0.0
    %143 = vmatpush1.msra.mxu0 0.0
    %144 = vmatprep.subr.mxu0 0.0
    %145 = vmatpush1.msra.mxu0 0.0
    %146 = vmatprep.subr.mxu0 0.0
    %147 = vmatpush1.msra.mxu0 0.0
    %148 = vmatprep.subr.mxu0 0.0
    %149 = vmatpush1.msra.mxu0 0.0
    %150 = vmatprep.subr.mxu0 0.0
    %151 = vmatpush1.msra.mxu0 0.0
    %152 = vmatprep.subr.mxu0 0.0
    %153 = vmatpush1.msra.mxu0 0.0
    %154 = vmatprep.subr.mxu0 0.0
    %155 = vmatpush1.msra.mxu0 0.0
    %156 = vmatprep.subr.mxu0 0.0
    %157 = vmatpush1.msra.mxu0 0.0
    %158 = vmatprep.subr.mxu0 0.0
    %159 = vmatpush1.msra.mxu0 0.0
    %160 = vmatprep.subr.mxu0 0.0
    %161 = vmatpush1.msra.mxu0 0.0
    %162 = vmatprep.subr.mxu0 0.0
    %163 = vmatpush1.msra.mxu0 0.0
    %164 = vmatprep.subr.mxu0 0.0
    %165 = vmatpush1.msra.mxu0 0.0
    %166 = vmatprep.subr.mxu0 0.0
    %167 = vmatpush1.msra.mxu0 0.0
    %168 = vmatprep.subr.mxu0 0.0
    %169 = vmatpush1.msra.mxu0 0.0
    %170 = vmatprep.subr.mxu0 0.0
    %171 = vmatpush1.msra.mxu0 0.0
    %172 = vmatprep.subr.mxu0 0.0
    %173 = vmatpush1.msra.mxu0 0.0
    %174 = vmatprep.subr.mxu0 0.0
    %175 = vmatpush1.msra.mxu0 0.0
    %176 = vmatprep.subr.mxu0 0.0
    %177 = vmatpush1.msra.mxu0 0.0
    %178 = vmatprep.subr.mxu0 0.0
    %179 = vmatpush1.msra.mxu0 0.0
    %180 = vmatprep.subr.mxu0 0.0
    %181 = vmatpush1.msra.mxu0 0.0
    %182 = vmatprep.subr.mxu0 0.0
    %183 = vmatpush1.msra.mxu0 0.0
    %184 = vmatprep.subr.mxu0 0.0
    %185 = vmatpush1.msra.mxu0 0.0
    %186 = vmatprep.subr.mxu0 0.0
    %187 = vmatpush1.msra.mxu0 0.0
    %188 = vmatprep.subr.mxu0 0.0
    %189 = vmatpush1.msra.mxu0 0.0
    %190 = vmatprep.subr.mxu0 0.0
    %191 = vmatpush1.msra.mxu0 0.0
    %192 = vmatprep.subr.mxu0 0.0
    %193 = vmatpush1.msra.mxu0 0.0
    %194 = vmatprep.mubr.f32.mxu0 0.0
    %195 = vmatmul.mubr.f32.gmra.mrb[0].mxu0 %v125
    %v196 = vpop.f32.mrb[0].mxu0
    %v197 = vadd.f32 %v121, %v196
    %v198 = vpop.f32.mrb[0].mxu0
    %199 = vmatprep.mubr.f32.mxu0 0.0
    %200 = vmatmul.mubr.f32.gmra.mrb[0].mxu0 %v128
    %v201 = vpop.f32.mrb[0].mxu0
    %v202 = vadd.f32 %v121, %v201
    %v203 = vpop.f32.mrb[0].mxu0
    %204 = vdwg.mxu0
    %v205 = vmax.f32 %v197, 0.0
    %v206 = vmax.f32 %v202, 0.0
    %v207 = vld [vmem:[%s8] sm:$0xff]
    %v208 = vld [vmem:[%s8 + $0x8] sm:$0xff]
    %v209 = vld [vmem:[%s8 + $0x10] sm:$0xff]
    %v210 = vld [vmem:[%s8 + $0x18] sm:$0xff]
    %v211 = vld [vmem:[%s8 + $0x20] sm:$0xff]
    %v212 = vld [vmem:[%s8 + $0x28] sm:$0xff]
    %v213 = vld [vmem:[%s8 + $0x30] sm:$0xff]
    %v214 = vld [vmem:[%s8 + $0x38] sm:$0xff]
    %v215 = vld [vmem:[%s9] sm:$0x1]
    %v217 = vlaneseq
    %v218 = vshrl.u32 %v217, 7
    %v219 = vsub.s32 0, %v218
    %v220 = vrot.slane %v215, %v219
    %vm222 = vcmask 523264
    %v224 = vsel %vm222, %v205, 0
    %v227 = vsel %vm222, %v206, 0
    %229 = vmatprep.subr.mxu0 0.0
    %230 = vmatpush1.msra.mxu0 %v207
    %231 = vmatprep.subr.mxu0 0.0
    %232 = vmatpush1.msra.mxu0 %v208
    %233 = vmatprep.subr.mxu0 0.0
    %234 = vmatpush1.msra.mxu0 %v209
    %235 = vmatprep.subr.mxu0 0.0
    %236 = vmatpush1.msra.mxu0 %v210
    %237 = vmatprep.subr.mxu0 0.0
    %238 = vmatpush1.msra.mxu0 %v211
    %239 = vmatprep.subr.mxu0 0.0
    %240 = vmatpush1.msra.mxu0 %v212
    %241 = vmatprep.subr.mxu0 0.0
    %242 = vmatpush1.msra.mxu0 %v213
    %243 = vmatprep.subr.mxu0 0.0
    %244 = vmatpush1.msra.mxu0 %v214
    %245 = vmatprep.subr.mxu0 0.0
    %246 = vmatpush1.msra.mxu0 0.0
    %247 = vmatprep.subr.mxu0 0.0
    %248 = vmatpush1.msra.mxu0 0.0
    %249 = vmatprep.subr.mxu0 0.0
    %250 = vmatpush1.msra.mxu0 0.0
    %251 = vmatprep.subr.mxu0 0.0
    %252 = vmatpush1.msra.mxu0 0.0
    %253 = vmatprep.subr.mxu0 0.0
    %254 = vmatpush1.msra.mxu0 0.0
    %255 = vmatprep.subr.mxu0 0.0
    %256 = vmatpush1.msra.mxu0 0.0
    %257 = vmatprep.subr.mxu0 0.0
    %258 = vmatpush1.msra.mxu0 0.0
    %259 = vmatprep.subr.mxu0 0.0
    %260 = vmatpush1.msra.mxu0 0.0
    %261 = vmatprep.subr.mxu0 0.0
    %262 = vmatpush1.msra.mxu0 0.0
    %263 = vmatprep.subr.mxu0 0.0
    %264 = vmatpush1.msra.mxu0 0.0
    %265 = vmatprep.subr.mxu0 0.0
    %266 = vmatpush1.msra.mxu0 0.0
    %267 = vmatprep.subr.mxu0 0.0
    %268 = vmatpush1.msra.mxu0 0.0
    %269 = vmatprep.subr.mxu0 0.0
    %270 = vmatpush1.msra.mxu0 0.0
    %271 = vmatprep.subr.mxu0 0.0
    %272 = vmatpush1.msra.mxu0 0.0
    %273 = vmatprep.subr.mxu0 0.0
    %274 = vmatpush1.msra.mxu0 0.0
    %275 = vmatprep.subr.mxu0 0.0
    %276 = vmatpush1.msra.mxu0 0.0
    %277 = vmatprep.subr.mxu0 0.0
    %278 = vmatpush1.msra.mxu0 0.0
    %279 = vmatprep.subr.mxu0 0.0
    %280 = vmatpush1.msra.mxu0 0.0
    %281 = vmatprep.subr.mxu0 0.0
    %282 = vmatpush1.msra.mxu0 0.0
    %283 = vmatprep.subr.mxu0 0.0
    %284 = vmatpush1.msra.mxu0 0.0
    %285 = vmatprep.subr.mxu0 0.0
    %286 = vmatpush1.msra.mxu0 0.0
    %287 = vmatprep.subr.mxu0 0.0
    %288 = vmatpush1.msra.mxu0 0.0
    %289 = vmatprep.subr.mxu0 0.0
    %290 = vmatpush1.msra.mxu0 0.0
    %291 = vmatprep.subr.mxu0 0.0
    %292 = vmatpush1.msra.mxu0 0.0
    %293 = vmatprep.mubr.f32.mxu0 0.0
    %294 = vmatmul.mubr.f32.gmra.mrb[0].mxu0 %v224
    %v295 = vpop.f32.mrb[0].mxu0
    %v296 = vadd.f32 %v220, %v295
    %v297 = vpop.f32.mrb[0].mxu0
    %298 = vmatprep.mubr.f32.mxu0 0.0
    %299 = vmatmul.mubr.f32.gmra.mrb[0].mxu0 %v227
    %v300 = vpop.f32.mrb[0].mxu0
    %v301 = vadd.f32 %v220, %v300
    %v302 = vpop.f32.mrb[0].mxu0
    %303 = vdwg.mxu0
    %s304 = smul.u32 0, 16
    %v305 = vlaneseq
    %v306 = vshrl.u32 %v305, 7
    %v307 = vadd.s32 %v306, 8
    %v308 = vstv %s304
    %v309 = vadd.s32 %v308, %v306
    %v310 = vadd.s32 %v308, %v307
    %s311 = sld [smem:[#allocation3]]
    %v312 = vstv %s311
    %vm313 = vcmp.lt.s32.totalorder %v309, %v312
    %vm314 = vcmp.lt.s32.totalorder %v310, %v312
    %v315 = vsel %vm313, 1, 0
    %v316 = vsel %vm314, 1, 0
    %v317 = vcvt.s32.f32 %v315
    %v318 = vcvt.s32.f32 %v316
    %v319 = vsel %vm67, %v296, -inf
    %320 = vmax.xlane.f32.xlu0 %v319
    %v321 = vpop.xlane.xlu0 %320
    %v322 = vsel %vm67, %v301, -inf
    %323 = vmax.xlane.f32.xlu0 %v322
    %v324 = vpop.xlane.xlu0 %323
    %v325 = vsub.f32 %v296, %v321
    %v326 = vsub.f32 %v301, %v324
    %v327 = vmul.f32 %v325, 1.442695
    %v328 = vpow.pop %v327
    %v329 = vmul.f32 %v326, 1.442695
    %v330 = vpow.pop %v329
    %v331 = vsel %vm67, %v328, 0.0
    %332 = vadd.xlane.f32.xlu0 %v331
    %v333 = vpop.xlane.xlu0 %332
    %v334 = vsel %vm67, %v330, 0.0
    %335 = vadd.xlane.f32.xlu0 %v334
    %v336 = vpop.xlane.xlu0 %335
    %v337 = vlog2.pop %v333
    %v338 = vmul.f32 %v337, 0.6931472
    %v339 = vlog2.pop %v336
    %v340 = vmul.f32 %v339, 0.6931472
    %v341 = vadd.f32 %v321, %v338
    %v342 = vadd.f32 %v324, %v340
    %v343 = vsub.f32 %v296, %v341
    %v344 = vsub.f32 %v301, %v342
    %v345 = vmul.f32 %v35, %v343
    %v346 = vmul.f32 %v36, %v344
    %v347 = vsel %vm67, %v345, 0.0
    %348 = vadd.xlane.f32.xlu0 %v347
    %v349 = vpop.xlane.xlu0 %348
    %v350 = vsel %vm67, %v346, 0.0
    %351 = vadd.xlane.f32.xlu0 %v350
    %v352 = vpop.xlane.xlu0 %351
    %v353 = vsub.f32 0.0, %v349
    %v354 = vsub.f32 0.0, %v352
    %v355 = vmul.f32 %v353, %v317
    %v356 = vmul.f32 %v354, %v318
    %v357 = vadd.f32 %v355, %v356
    %v358 = vrot.slane %v357, 4
    %v359 = vadd.f32 %v357, %v358
    %v360 = vrot.slane %v359, 2
    %v361 = vadd.f32 %v359, %v360
    %v362 = vrot.slane %v361, 1
    %v363 = vadd.f32 %v361, %v362
    %v364 = vld [vmem:[%s4] sm:$0xff]
    %v365 = vld [vmem:[%s4 + $0x8] sm:$0xff]
    %368 = vrot.lane.b32.xlu0 %v364, 20
    %v369 = vpop.permute.xlu0 %368
    %370 = vrot.lane.b32.xlu0 %v365, 20
    %v371 = vpop.permute.xlu0 %370
    %v374 = vsub.f32 %v296, %v369
    %v375 = vsub.f32 %v301, %v371
    %v376 = vmul.f32 %v374, %v317
    %v377 = vmul.f32 %v375, %v318
    %v378 = vmul.f32 %v376, %v376
    %v379 = vmul.f32 %v377, %v377
    %vm380 = vcmask 171168
    %v381 = vsel %vm380, %v378, 0.0
    %v382 = vsel %vm380, %v379, 0.0
    %v383 = vadd.f32 %v381, %v382
    %v384 = vrot.slane %v383, 4
    %v385 = vadd.f32 %v383, %v384
    %v386 = vrot.slane %v385, 2
    %v387 = vadd.f32 %v385, %v386
    %v388 = vrot.slane %v387, 1
    %v389 = vadd.f32 %v387, %v388
    %391 = vrot.lane.b32.xlu0 %v389, 109
    %v392 = vpop.permute.xlu0 %391
    %vm394 = vcmask 7168
    %v395 = vsel %vm394, %v363, %v392
    %vm396 = vcmask 8192
    %397 = vst.msk [vmem:[#allocation4] sm:$0x1] %vm396, %v395
    // Predicated region
    $region38: #{tpu_custom_call.1} parent=1 // pred_check
      _
    $region39: #{tpu_custom_call.1} parent=1 // pred_check_branch
      %399 = sbr.rel (0) target = $region41
    $region40: #{tpu_custom_call.1} parent=1 // pred_region
      %s401 = ssub.s32 16, 16
      %402 = vsyncadd [#allocation5], %s401
      %s404 = sshll.u32 [#allocation4], 4
      %s405 = int_to_ptr.vmem [resolvable:$true] %s404
      %407 = dma.vmem_to_hbm [thread:$0]  %s405, 16, %s10, [#allocation5]
    $region41: #{tpu_custom_call.1} parent=1 // pred_fallthru
      _
    // Predicated region
    $region42: #{tpu_custom_call.1} parent=1 // pred_check
      _
    $region43: #{tpu_custom_call.1} parent=1 // pred_check_branch
      %409 = sbr.rel (0) target = $region45
    $region44: #{tpu_custom_call.1} parent=1 // pred_region
      %410 = dma.done [#allocation5], 16
    $region45: #{tpu_custom_call.1} parent=1 // pred_fallthru
      _
    %411 = vsyncpa [#allocation5], 1

</llo_original>
